<compile_context>
chip_gen: v5e
topology: v5e:2x2
jax: 0.10.0
libtpu: 0.0.40
codegen_flags: <defaults>
</compile_context>

<pallas_src>
import jax
import jax.numpy as jnp
from jax.experimental import pallas as pl
from jax.experimental.pallas import tpu as pltpu


def positional_encoding(d_model: int, max_length: int) -> jnp.ndarray:
    """JAX mirror of the torch positional_encoding helper. Shape (max_length, d_model)."""
    i = jnp.arange(0, d_model, 2, dtype=jnp.float32) / d_model
    pos = jnp.arange(0, max_length, dtype=jnp.float32)[:, None]
    angle_freq = jnp.exp(i * -jnp.log(jnp.float32(10000.0)))
    out = jnp.zeros((max_length, d_model), dtype=jnp.float32)
    out = out.at[:, 0::2].set(jnp.sin(pos * angle_freq))
    out = out.at[:, 1::2].set(jnp.cos(pos * angle_freq))
    return out


def _embed_kernel(ids_ref, emb_ref, pos_ref, out_ref):
    # ids_ref: (1, TS, 1) int32  -- token ids for this tile (values on sublanes)
    # emb_ref: (V, D)            -- full embedding table, resident in VMEM
    # pos_ref: (TS, D)           -- positional-encoding rows for this tile
    # out_ref: (1, TS, D)
    ids = ids_ref[0]                         # (TS, 1) int32
    ts = ids.shape[0]
    vocab = emb_ref.shape[0]

    # One-hot gather matrix built on the VPU, gather executed on the MXU.
    vocab_iota = jax.lax.broadcasted_iota(jnp.int32, (ts, vocab), dimension=1)
    onehot = (ids == vocab_iota).astype(emb_ref.dtype)            # (TS, V)
    gathered = jnp.dot(onehot, emb_ref[...],
                       preferred_element_type=jnp.float32)        # (TS, D) f32

    out_ref[0] = (gathered + pos_ref[...].astype(jnp.float32)).astype(out_ref.dtype)
    # TODO(synk): dropout with p > 0 would use pltpu.prng_seed + prng_random_bits
    #             per tile; module default p=0.0 -> identity.


def _choose_tile(seq_len: int) -> int:
    """Largest nice token-tile that evenly divides S; fall back to whole S."""
    for ts in (512, 256, 128):
        if seq_len % ts == 0:
            return ts
    return seq_len  # block == full dim, always legal


def embedding_forward(ids: jnp.ndarray,
                      emb_table: jnp.ndarray,
                      pos_enc: jnp.ndarray) -> jnp.ndarray:
    """ids: (B, S) int; emb_table: (V, D) f32; pos_enc: (L, D) f32 -> (B, S, D) f32."""
    B, S = ids.shape
    V, D = emb_table.shape
    assert pos_enc.shape[0] >= S, "sequence length exceeds max_length"
    assert pos_enc.shape[1] == D

    # Guard against out-of-range token ids (OOB reads are silent otherwise).
    ids32 = jnp.clip(ids.astype(jnp.int32), 0, V - 1)

    # Match torch: self.pos_encoding[:sequence_length]
    pos = pos_enc[:S]

    TS = _choose_tile(S)
    assert S % TS == 0
    ids3 = ids32.reshape(B, S, 1)  # ids land on sublanes inside the kernel

    # VMEM budget: resident table + double-buffered per-tile blocks (+ slack).
    itemsize = jnp.dtype(emb_table.dtype).itemsize
    table_bytes = V * D * itemsize
    tile_bytes = 2 * (TS * D * itemsize + TS * D * itemsize + TS * 4)
    vmem_limit = int(min(max(table_bytes + tile_bytes + (4 << 20), 32 << 20),
                         96 << 20))

    grid_spec = pltpu.PrefetchScalarGridSpec(
        num_scalar_prefetch=0,
        grid=(B, S // TS),
        in_specs=[
            # token ids for this (batch, sequence-tile)
            pl.BlockSpec((1, TS, 1), lambda b, s: (b, s, 0)),
            # full embedding table, constant index_map -> resident across grid
            pl.BlockSpec((V, D), lambda b, s: (0, 0)),
            # positional-encoding rows for this sequence tile
            pl.BlockSpec((TS, D), lambda b, s: (s, 0)),
        ],
        out_specs=pl.BlockSpec((1, TS, D), lambda b, s: (b, s, 0)),
    )

    return pl.pallas_call(
        _embed_kernel,
        out_shape=jax.ShapeDtypeStruct((B, S, D), emb_table.dtype),
        grid_spec=grid_spec,
        compiler_params=pltpu.CompilerParams(
            dimension_semantics=("parallel", "parallel"),
            vmem_limit_bytes=vmem_limit),
    )(ids3, emb_table, pos)


if __name__ == "__main__":
    # Module hyper-parameters (small, d_model=128 keeps the output lane-dense)
    vocab_size = 64
    d_model = 128
    max_length = 32
    batch, seq = 2, 16

    key = jax.random.PRNGKey(0)
    k_emb, k_ids = jax.random.split(key)

    # Deterministic parameter init (nn.Embedding default: standard normal)
    emb_table = jax.random.normal(k_emb, (vocab_size, d_model), dtype=jnp.float32)
    pos_enc = positional_encoding(d_model=d_model, max_length=max_length)

    # Example input token ids
    ids = jax.random.randint(k_ids, (batch, seq), 0, vocab_size, dtype=jnp.int32)

    out = embedding_forward(ids, emb_table, pos_enc)
    out = jax.block_until_ready(out)

    # Pure-JAX reference check
    ref = emb_table[ids] + pos_enc[:seq][None, :, :]
    assert out.shape == (batch, seq, d_model)
    assert jnp.allclose(out, ref, atol=1e-5, rtol=1e-5), "mismatch vs reference"

    print("KERNEL_OK")
</pallas_src>

<mosaic_0001>
module attributes {stable_mosaic.version = 11 : i64} {
  func.func @_embed_kernel(%arg0: i32, %arg1: i32, %arg2: memref<1x16x1xi32, #tpu.memory_space<vmem>>, %arg3: memref<64x128xf32, #tpu.memory_space<vmem>>, %arg4: memref<16x128xf32, #tpu.memory_space<vmem>>, %arg5: memref<1x16x128xf32, #tpu.memory_space<vmem>>) attributes {dimension_semantics = [#tpu.dimension_semantics<parallel>, #tpu.dimension_semantics<parallel>], iteration_bounds = array<i64: 2, 1>, scalar_prefetch = 0 : i64, scratch_operands = 0 : i64, tpu.core_type = #tpu.core_type<tc>, window_params = [{transform_indices = @transform_0, window_bounds = array<i64: 1, 16, 1>}, {pipeline_mode = #tpu.pipeline_mode<synchronous>, transform_indices = @transform_1, window_bounds = array<i64: 64, 128>}, {transform_indices = @transform_2, window_bounds = array<i64: 16, 128>}, {transform_indices = @transform_3, window_bounds = array<i64: 1, 16, 128>}]} {
    %c0 = arith.constant 0 : index
    %c0_0 = arith.constant 0 : index
    %c0_1 = arith.constant 0 : index
    %0 = vector.load %arg2[%c0, %c0_0, %c0_1] : memref<1x16x1xi32, #tpu.memory_space<vmem>>, vector<1x16x1xi32>
    %1 = vector.shape_cast %0 : vector<1x16x1xi32> to vector<16x1xi32>
    %2 = tpu.iota {dimensions = array<i32: 1>} : vector<16x64xi32>
    %3 = vector.broadcast %1 : vector<16x1xi32> to vector<16x64xi32>
    %4 = arith.cmpi eq, %3, %2 : vector<16x64xi32>
    %5 = arith.extui %4 : vector<16x64xi1> to vector<16x64xi32>
    %6 = arith.sitofp %5 : vector<16x64xi32> to vector<16x64xf32>
    %c0_2 = arith.constant 0 : index
    %c0_3 = arith.constant 0 : index
    %7 = vector.load %arg3[%c0_2, %c0_3] : memref<64x128xf32, #tpu.memory_space<vmem>>, vector<64x128xf32>
    %cst = arith.constant dense<0.000000e+00> : vector<16x128xf32>
    %8 = tpu.matmul %6, %7, %cst {dimension_numbers = #tpu.dot_dimension_numbers<[1], [0], [0], [1], [0, 0, 1, 1], [], []>} : vector<16x64xf32>, vector<64x128xf32>, vector<16x128xf32> -> vector<16x128xf32>
    %c0_4 = arith.constant 0 : index
    %c0_5 = arith.constant 0 : index
    %9 = vector.load %arg4[%c0_4, %c0_5] : memref<16x128xf32, #tpu.memory_space<vmem>>, vector<16x128xf32>
    %10 = arith.addf %8, %9 : vector<16x128xf32>
    %c0_6 = arith.constant 0 : index
    %c0_7 = arith.constant 0 : index
    %c0_8 = arith.constant 0 : index
    %11 = vector.load %arg5[%c0_6, %c0_7, %c0_8] : memref<1x16x128xf32, #tpu.memory_space<vmem>>, vector<1x16x128xf32>
    %12 = vector.shape_cast %11 : vector<1x16x128xf32> to vector<16x128xf32>
    %13 = vector.shape_cast %10 : vector<16x128xf32> to vector<1x16x128xf32>
    tpu.vector_store %arg5[%c0_6, %c0_7, %c0_8], %13 {strides = array<i32>} : memref<1x16x128xf32, #tpu.memory_space<vmem>>, vector<1x16x128xf32>,
    return
  }
  func.func @transform_0(%arg0: i32, %arg1: i32) -> (i32, i32, i32) {
    %c0_i32 = arith.constant 0 : i32
    %c0_i32_0 = arith.constant 0 : i32
    return %arg0, %arg1, %c0_i32 : i32, i32, i32
  }
  func.func @transform_1(%arg0: i32, %arg1: i32) -> (i32, i32) {
    %c0_i32 = arith.constant 0 : i32
    %c0_i32_0 = arith.constant 0 : i32
    %c0_i32_1 = arith.constant 0 : i32
    return %c0_i32, %c0_i32_0 : i32, i32
  }
  func.func @transform_2(%arg0: i32, %arg1: i32) -> (i32, i32) {
    %c0_i32 = arith.constant 0 : i32
    %c0_i32_0 = arith.constant 0 : i32
    return %arg1, %c0_i32 : i32, i32
  }
  func.func @transform_3(%arg0: i32, %arg1: i32) -> (i32, i32, i32) {
    %c0_i32 = arith.constant 0 : i32
    %c0_i32_0 = arith.constant 0 : i32
    return %arg0, %arg1, %c0_i32 : i32, i32, i32
  }
}

</mosaic_0001>

<llo_original>
// kernel: tpu_custom_call.1
$region0: #{tpu_custom_call.1}
  #allocation0 [shape = 'u32[]', space=smem, size = 0x4, offset = 0x4, fixed_abs, tag = 'smem constant byte address 0x4 - core index']
  #allocation1 [shape = 'u32[72,128]{1,0:T(1,128)}', space=vmem, size = 0x9000, scoped, tag = 'internal scratch']
  %s0 = inlined_call_operand.vmem [shape: s32[2,16,1], index: 0, kind: input, shape index: {}]
  %s1 = inlined_call_operand.hbm [shape: f32[64,128], index: 1, kind: input, shape index: {}]
  %s2 = inlined_call_operand.vmem [shape: f32[16,128], index: 2, kind: input, shape index: {}]
  %s3 = inlined_call_operand.hbm [shape: f32[2,16,128], index: 3, kind: output, shape index: {}]
  %s4 = sld [smem:[#allocation0]]
  $region49: #{tpu_custom_call.1} parent=0
    _
  %s6 = ssub.s32 1, %s4
  %s7 = scalar_select 0, %s6, %s4
  $region1: #{tpu_custom_call.1} parent=0
    #allocation2 [shape = 'u8[32768]{0}', space=vmem, size = 0x8000, scoped, tag = 'input window, operand 1, single buffered']
    #allocation3 [shape = 's32[2]{0}', space=sflag, size = 0x8, scoped, tag = 'scoped memory for tpu_custom_call.1']
    #allocation4 [shape = 's32[2]{0}', space=sflag, size = 0x8, scoped, tag = 'scoped memory for tpu_custom_call.1']
    #allocation5 [shape = 'u8[16384]{0}', space=vmem, size = 0x4000, scoped, tag = 'output window, operand 0']
    %8 = vsyncpa [#allocation3], 0
    %9 = vsyncpa [#allocation4], 0
    %s10 = scalar_lea.sflag [#allocation4], 1
    %11 = vsyncpa %s10, 0
    loop: start=0, step=1, limit=4
    $region2: #{tpu_custom_call.1} parent=1 // loop_pre_header
      _
    $region3: #{tpu_custom_call.1} parent=1 // loop_header
      %s13 = sphi 0, %s17
      %p14 = scmp.ge.s32.totalorder %s13, 4
      %s20 = sphi 0, %s32
      %s21 = sphi 0, %s28
      %s22 = sphi 0, %s20
      %s23 = sphi 0, %s21
      %s24 = sphi 0, %s22
      %s25 = sphi 0, %s23
      %s37 = sphi 0, %s39
      %s40 = sphi 0, %s37
      %s41 = sphi 0, %s40
      %s57 = sphi 0, %s41
      %s61 = sphi 0, %s61
      %s63 = sphi 0, %s61
      %s64 = sphi 0, %s63
      %s78 = sphi 0, %s64
      %s84 = sphi 0, %s86
      %s87 = sphi 0, %s84
      %s88 = sphi 0, %s87
      %s104 = sphi 0, %s88
      %s112 = sphi 0, %s114
      %s115 = sphi 0, %s112
      %s116 = sphi 0, %s115
      %s132 = sphi 0, %s116
    $region4: #{tpu_custom_call.1} parent=1 // loop_header_branch
      %16 = sbr.rel (%p14) target = $region8
    $region5: #{tpu_custom_call.1} parent=1 // loop_body
      %s18 = ssub.s32 %s13, 1
      %s19 = ssub.s32 %s13, 2
      %s26 = sadd.s32 1, %s21
      %p27 = scmp.ge.s32.totalorder %s26, 1
      %s28 = scalar_select %p27, 0, %s26
      %s29 = sadd.s32 1, %s20
      %s30 = scalar_select %p27, %s29, %s20
      %p31 = scmp.ge.s32.totalorder %s30, 2
      %s32 = scalar_select %p31, 0, %s30
      %s33 = ssub.s32 %s20, %s32
      %s34 = ssub.s32 %s21, %s28
      %s35 = sor.u32 %s33, %s34
      %p36 = scmp.eq.s32.totalorder %s35, 0
      %s38 = sadd.s32 %s37, 1
      %s39 = scalar_select %p36, %s37, %s38
      %p42 = pneg %p36
      %p43 = scmp.eq.s32.totalorder %s13, 1
      %p44 = por %p42, %p43
      %p45 = scmp.ne.s32.totalorder %s37, %s40
      %p46 = scmp.eq.s32.totalorder %s13, 0
      %p47 = por %p45, %p46
      %p48 = scmp.ne.s32.totalorder %s37, %s40
      %p49 = scmp.eq.s32.totalorder %s18, 1
      %p50 = por %p48, %p49
      %p51 = scmp.ne.s32.totalorder %s40, %s41
      %p52 = scmp.eq.s32.totalorder %s18, 0
      %p53 = por %p51, %p52
      %p54 = scmp.ne.s32.totalorder %s40, %s41
      %p55 = scmp.eq.s32.totalorder %s19, 1
      %p56 = por %p54, %p55
      %p58 = scmp.ne.s32.totalorder %s41, %s57
      %p59 = scmp.eq.s32.totalorder %s19, 0
      %p60 = por %p58, %p59
      %s62 = sadd.s32 %s61, 1
      %p65 = scmp.eq.s32.totalorder %s13, 1
      %p66 = scmp.ne.s32.totalorder %s61, %s63
      %p67 = scmp.eq.s32.totalorder %s13, 0
      %p68 = por %p66, %p67
      %p69 = scmp.ne.s32.totalorder %s61, %s63
      %p70 = scmp.eq.s32.totalorder %s18, 1
      %p71 = por %p69, %p70
      %p72 = scmp.ne.s32.totalorder %s63, %s64
      %p73 = scmp.eq.s32.totalorder %s18, 0
      %p74 = por %p72, %p73
      %p75 = scmp.ne.s32.totalorder %s63, %s64
      %p76 = scmp.eq.s32.totalorder %s19, 1
      %p77 = por %p75, %p76
      %p79 = scmp.ne.s32.totalorder %s64, %s78
      %p80 = scmp.eq.s32.totalorder %s19, 0
      %p81 = por %p79, %p80
      %s82 = ssub.s32 %s21, %s28
      %p83 = scmp.eq.s32.totalorder %s82, 0
      %s85 = sadd.s32 %s84, 1
      %s86 = scalar_select %p83, %s84, %s85
      %p89 = pneg %p83
      %p90 = scmp.eq.s32.totalorder %s13, 1
      %p91 = por %p89, %p90
      %p92 = scmp.ne.s32.totalorder %s84, %s87
      %p93 = scmp.eq.s32.totalorder %s13, 0
      %p94 = por %p92, %p93
      %p95 = scmp.ne.s32.totalorder %s84, %s87
      %p96 = scmp.eq.s32.totalorder %s18, 1
      %p97 = por %p95, %p96
      %p98 = scmp.ne.s32.totalorder %s87, %s88
      %p99 = scmp.eq.s32.totalorder %s18, 0
      %p100 = por %p98, %p99
      %p101 = scmp.ne.s32.totalorder %s87, %s88
      %p102 = scmp.eq.s32.totalorder %s19, 1
      %p103 = por %p101, %p102
      %p105 = scmp.ne.s32.totalorder %s88, %s104
      %p106 = scmp.eq.s32.totalorder %s19, 0
      %p107 = por %p105, %p106
      %s108 = ssub.s32 %s20, %s32
      %s109 = ssub.s32 %s21, %s28
      %s110 = sor.u32 %s108, %s109
      %p111 = scmp.eq.s32.totalorder %s110, 0
      %s113 = sadd.s32 %s112, 1
      %s114 = scalar_select %p111, %s112, %s113
      %p117 = pneg %p111
      %p118 = scmp.eq.s32.totalorder %s13, 1
      %p119 = por %p117, %p118
      %p120 = scmp.ne.s32.totalorder %s112, %s115
      %p121 = scmp.eq.s32.totalorder %s13, 0
      %p122 = por %p120, %p121
      %p123 = scmp.ne.s32.totalorder %s112, %s115
      %p124 = scmp.eq.s32.totalorder %s18, 1
      %p125 = por %p123, %p124
      %p126 = scmp.ne.s32.totalorder %s115, %s116
      %p127 = scmp.eq.s32.totalorder %s18, 0
      %p128 = por %p126, %p127
      %p129 = scmp.ne.s32.totalorder %s115, %s116
      %p130 = scmp.eq.s32.totalorder %s19, 1
      %p131 = por %p129, %p130
      %p133 = scmp.ne.s32.totalorder %s116, %s132
      %p134 = scmp.eq.s32.totalorder %s19, 0
      %p135 = por %p133, %p134
      %p136 = scmp.le.s32.totalorder 1, %s13
      %p137 = scmp.lt.s32.totalorder %s13, 3
      %p138 = pnand %p136, %p137
      %p139 = pneg %p138
      // Predicated region
      $region9: #{tpu_custom_call.1} parent=5 // pred_check
        _
      $region10: #{tpu_custom_call.1} parent=5 // pred_check_branch
        %141 = sbr.rel (%p138) target = $region12
      $region11: #{tpu_custom_call.1} parent=5 // pred_region
        %s142 = ssub.s32 %s13, 1
        // Predicated region
        $region13: #{tpu_custom_call.1} parent=11 // pred_check
          %p143 = pneg %p74
        $region14: #{tpu_custom_call.1} parent=11 // pred_check_branch
          %145 = sbr.rel (%p143) target = $region16
        $region15: #{tpu_custom_call.1} parent=11 // pred_region
          %147 = vsyncadd [#allocation3], 0
          %s148 = sshll.u32 %s1, 4
          %s149 = int_to_ptr.hbm [resolvable:$true] %s148
          %s150 = sshll.u32 [#allocation2], 4
          %s151 = int_to_ptr.vmem [resolvable:$true] %s150
          %156 = dma.hbm_to_vmem [thread:$0]  %s149, 1024, %s151, [#allocation3], 128, 128, 8
        $region16: #{tpu_custom_call.1} parent=11 // pred_fallthru
          _
        // Predicated region
        $region17: #{tpu_custom_call.1} parent=11 // pred_check
          %p157 = pneg %p100
        $region18: #{tpu_custom_call.1} parent=11 // pred_check_branch
          %159 = sbr.rel (%p157) target = $region20
        $region19: #{tpu_custom_call.1} parent=11 // pred_region
          %s160 = smul.u32 2, %s23
          %p161 = scmp.lt.s32.totalorder %s160, 1
          %s162 = scalar_select %p161, %s160, 1
          %s163 = smul.addr %s162, 8
          %s164 = scalar_lea.vmem %s2, %s163
          %s165 = smul.u32 2, %s23
        $region20: #{tpu_custom_call.1} parent=11 // pred_fallthru
          _
      $region12: #{tpu_custom_call.1} parent=5 // pred_fallthru
        _
      %p166 = scmp.lt.s32.totalorder %s13, 2
      // Predicated region
      $region21: #{tpu_custom_call.1} parent=5 // pred_check
        %p167 = pneg %p166
      $region22: #{tpu_custom_call.1} parent=5 // pred_check_branch
        %169 = sbr.rel (%p167) target = $region24
      $region23: #{tpu_custom_call.1} parent=5 // pred_region
        // Predicated region
        $region25: #{tpu_custom_call.1} parent=23 // pred_check
          %p170 = pneg %p47
        $region26: #{tpu_custom_call.1} parent=23 // pred_check_branch
          %172 = sbr.rel (%p170) target = $region28
        $region27: #{tpu_custom_call.1} parent=23 // pred_region
          %s173 = smul.u32 2, %s21
          %p174 = scmp.lt.s32.totalorder %s20, 1
          %s175 = scalar_select %p174, %s20, 1
          %p176 = scmp.lt.s32.totalorder %s173, 1
          %s177 = scalar_select %p176, %s173, 1
          %s178 = smul.addr %s175, 2
          %s179 = sadd.s32 %s177, %s178
          %s180 = smul.addr %s179, 8
          %s181 = scalar_lea.vmem %s0, %s180
          %s182 = smul.u32 2, %s21
        $region28: #{tpu_custom_call.1} parent=23 // pred_fallthru
          _
      $region24: #{tpu_custom_call.1} parent=5 // pred_fallthru
        _
      %p183 = scmp.le.s32.totalorder 1, %s13
      %p184 = scmp.lt.s32.totalorder %s13, 3
      %p185 = pnand %p183, %p184
      %p186 = pneg %p185
      // Predicated region
      $region29: #{tpu_custom_call.1} parent=5 // pred_check
        _
      $region30: #{tpu_custom_call.1} parent=5 // pred_check_branch
        %188 = sbr.rel (%p185) target = $region32
      $region31: #{tpu_custom_call.1} parent=5 // pred_region
        %s189 = ssub.s32 %s13, 1
        // Predicated region
        $region33: #{tpu_custom_call.1} parent=31 // pred_check
          %p190 = pneg %p74
        $region34: #{tpu_custom_call.1} parent=31 // pred_check_branch
          %192 = sbr.rel (%p190) target = $region36
        $region35: #{tpu_custom_call.1} parent=31 // pred_region
          %194 = dma.done [#allocation3], 1024
        $region36: #{tpu_custom_call.1} parent=31 // pred_fallthru
          _
        %s195 = smul.u32 2, %s23
        %p196 = scmp.lt.s32.totalorder %s22, 1
        %s197 = scalar_select %p196, %s22, 1
        %p198 = scmp.lt.s32.totalorder %s195, 1
        %s199 = scalar_select %p198, %s195, 1
        %s200 = smul.addr %s197, 2
        %s201 = sadd.s32 %s199, %s200
        %s202 = smul.addr %s201, 8
        %s203 = scalar_lea.vmem %s0, %s202
        %p204 = pneg %p53
        %p205 = pneg %p50
        %p206 = pneg %p74
        %p207 = pneg %p71
        %s208 = smul.u32 2, %s23
        %p209 = scmp.lt.s32.totalorder %s208, 1
        %s210 = scalar_select %p209, %s208, 1
        %s211 = smul.addr %s210, 8
        %s212 = scalar_lea.vmem %s2, %s211
        %p213 = pneg %p100
        %p214 = pneg %p97
        %p215 = pneg %p128
        %p216 = pneg %p125
        %s217 = sand.u32 %s115, 1
        %s218 = scalar_lea.sflag [#allocation4], %s217
        %s219 = sand.u32 %s115, 1
        %s220 = smul.addr %s219, 16
        %s221 = scalar_lea.vmem [#allocation5], %s220
        %s222 = smul.u32 2, %s23
        %p223 = scmp.lt.s32.totalorder %s22, 1
        %s224 = scalar_select %p223, %s22, 1
        %p225 = scmp.lt.s32.totalorder %s222, 1
        %s226 = scalar_select %p225, %s222, 1
        %s227 = smul.addr %s224, 2
        %s228 = sadd.s32 %s226, %s227
        %s229 = smul.addr %s228, 8
        %s230 = scalar_lea.vmem %s0, %s229
        %s231 = smul.u32 2, %s23
        %s232 = smul.u32 2, %s23
        %p233 = scmp.lt.s32.totalorder %s232, 1
        %s234 = scalar_select %p233, %s232, 1
        %s235 = smul.addr %s234, 8
        %s236 = scalar_lea.vmem %s2, %s235
        %s237 = smul.u32 2, %s23
        %s238 = smul.u32 2, %s23
        %v239 = vld [vmem:[%s230] sm:$0xff]
        %v240 = vld [vmem:[%s230 + $0x8] sm:$0xff]
        %v241 = vlaneseq
        %v242 = vand.u32 %v241, 127
        %243 = vset.pattern.permute.xlu0 0
        %244 = vperm.xlu0 %243, %v239
        %v245 = vpop.permute.xlu0 %244
        %246 = vset.pattern.permute.xlu0 0
        %247 = vperm.xlu0 %246, %v240
        %v248 = vpop.permute.xlu0 %247
        %vm249 = vcmp.eq.s32.totalorder %v245, %v242
        %vm250 = vcmp.eq.s32.totalorder %v248, %v242
        %v251 = vsel %vm249, 1, 0
        %v252 = vsel %vm250, 1, 0
        %v253 = vcvt.s32.f32 %v251
        %v254 = vcvt.s32.f32 %v252
        %v255 = vld [vmem:[#allocation2] sm:$0xff]
        %v256 = vld [vmem:[#allocation2 + $0x8] sm:$0xff]
        %v257 = vld [vmem:[#allocation2 + $0x10] sm:$0xff]
        %v258 = vld [vmem:[#allocation2 + $0x18] sm:$0xff]
        %v259 = vld [vmem:[#allocation2 + $0x20] sm:$0xff]
        %v260 = vld [vmem:[#allocation2 + $0x28] sm:$0xff]
        %v261 = vld [vmem:[#allocation2 + $0x30] sm:$0xff]
        %v262 = vld [vmem:[#allocation2 + $0x38] sm:$0xff]
        %v263 = vld [vmem:[%s236] sm:$0xff]
        %v264 = vld [vmem:[%s236 + $0x8] sm:$0xff]
        %vm265 = vcmask 523264
        %v267 = vsel %vm265, %v253, 0
        %v270 = vsel %vm265, %v254, 0
        %272 = vmatpush.msra.mxu0 0.0
        %273 = vmatpush.msra.mxu0 0.0
        %274 = vmatpush.msra.mxu0 0.0
        %275 = vmatpush.msra.mxu0 0.0
        %276 = vmatpush.msra.mxu0 0.0
        %277 = vmatpush.msra.mxu0 0.0
        %278 = vmatpush.msra.mxu0 0.0
        %279 = vmatpush.msra.mxu0 0.0
        %280 = vmatpush.msra.mxu0 %v262
        %281 = vmatpush.msra.mxu0 %v261
        %282 = vmatpush.msra.mxu0 %v260
        %283 = vmatpush.msra.mxu0 %v259
        %284 = vmatpush.msra.mxu0 %v258
        %285 = vmatpush.msra.mxu0 %v257
        %286 = vmatpush.msra.mxu0 %v256
        %287 = vmatpush.msra.mxu0 %v255
        %288 = vmatmul.f32.gmra.mxu0 %v267
        %v289 = vpop.f32.mrf.mxu0
        %v290 = vadd.f32 %v263, %v289
        %291 = vmatmul.f32.gmra.mxu0 %v270
        %v292 = vpop.f32.mrf.mxu0
        %v293 = vadd.f32 %v264, %v292
        %294 = vdwg.mxu0
        %295 = vst [vmem:[%s221] sm:$0xff] %v290
        %296 = vst [vmem:[%s221 + $0x8] sm:$0xff] %v293
        %s297 = sand.u32 %s115, 1
        %s298 = scalar_lea.sflag [#allocation4], %s297
        %s299 = sand.u32 %s115, 1
        %s300 = smul.addr %s299, 16
        %s301 = scalar_lea.vmem [#allocation5], %s300
        // Predicated region
        $region37: #{tpu_custom_call.1} parent=31 // pred_check
          %p302 = pneg %p125
        $region38: #{tpu_custom_call.1} parent=31 // pred_check_branch
          %304 = sbr.rel (%p302) target = $region40
        $region39: #{tpu_custom_call.1} parent=31 // pred_region
          %s305 = smul.u32 2, %s23
          %307 = vsyncadd %s298, 0
          %s308 = smul.addr %s22, 2
          %s309 = sadd.s32 %s305, %s308
          %s310 = smul.addr %s309, 8
          %s311 = scalar_lea.hbm %s3, %s310
          %s312 = sshll.u32 %s301, 4
          %s313 = int_to_ptr.vmem [resolvable:$true] %s312
          %s314 = sshll.u32 %s311, 4
          %s315 = int_to_ptr.hbm [resolvable:$true] %s314
          %320 = dma.vmem_to_hbm [thread:$0]  %s313, 256, %s315, %s298, 128, 128, 8
        $region40: #{tpu_custom_call.1} parent=31 // pred_fallthru
          _
      $region32: #{tpu_custom_call.1} parent=5 // pred_fallthru
        _
      %p321 = scmp.le.s32.totalorder 2, %s13
      // Predicated region
      $region41: #{tpu_custom_call.1} parent=5 // pred_check
        %p322 = pneg %p321
      $region42: #{tpu_custom_call.1} parent=5 // pred_check_branch
        %324 = sbr.rel (%p322) target = $region44
      $region43: #{tpu_custom_call.1} parent=5 // pred_region
        %s325 = ssub.s32 %s13, 2
        // Predicated region
        $region45: #{tpu_custom_call.1} parent=43 // pred_check
          %p326 = pneg %p131
        $region46: #{tpu_custom_call.1} parent=43 // pred_check_branch
          %328 = sbr.rel (%p326) target = $region48
        $region47: #{tpu_custom_call.1} parent=43 // pred_region
          %s329 = sand.u32 %s116, 1
          %s330 = scalar_lea.sflag [#allocation4], %s329
          %s331 = sand.u32 %s116, 1
          %s332 = smul.addr %s331, 16
          %s333 = scalar_lea.vmem [#allocation5], %s332
          %335 = dma.done %s330, 256
        $region48: #{tpu_custom_call.1} parent=43 // pred_fallthru
          _
      $region44: #{tpu_custom_call.1} parent=5 // pred_fallthru
        _
    $region6: #{tpu_custom_call.1} parent=1 // loop_footer
      %s17 = sadd.s32 1, %s13
    $region7: #{tpu_custom_call.1} parent=1 // loop_footer_branch
      %12 = sbr.rel target = $region3
    $region8: #{tpu_custom_call.1} parent=1 // loop_exit
      _
    %336 = vsyncpa [#allocation3], 1
    %s337 = scalar_lea.sflag [#allocation3], 1
    %338 = vsyncpa %s337, 1
    %339 = vsyncpa [#allocation4], 1
    %s340 = scalar_lea.sflag [#allocation4], 1
    %341 = vsyncpa %s340, 1

</llo_original>
